<compile_context>
chip_gen: v7x
topology: tpu7x:2x2x1
jax: 0.10.0
libtpu: 0.0.40
codegen_flags: <defaults>
</compile_context>

<pallas_src>
import jax
import jax.numpy as jnp
from jax.experimental import pallas as pl
from jax.experimental.pallas import tpu as pltpu

LANE = 128


def _round_up(a, b):
    return (a + b - 1) // b * b


def _pad_last(a, width):
    pad = [(0, 0)] * (a.ndim - 1) + [(0, width - a.shape[-1])]
    return jnp.pad(a, pad)


def _vmem_limit_bytes():
    """Generation-aware scoped-VMEM limit: ~75% of physical (48 MiB v7x, 96 MiB v5e/v6e)."""
    cap = 64 * 1024 * 1024
    try:
        info = pltpu.get_tpu_info()
        cap = int(getattr(info, "vmem_capacity_bytes", cap) or cap)
    except Exception:
        pass
    return max(32 * 1024 * 1024, (cap * 3) // 4)


# `pipeline_mode=pl.Buffered(...)` is a pure buffering hint; fall back silently if the
# installed JAX / Mosaic rejects it (semantics are identical either way).
_BUFFERED_OK = hasattr(pl, "Buffered")


def _spec(shape, index_map, buffers=None, use_buffered=True):
    if buffers is not None and buffers != 2 and use_buffered and _BUFFERED_OK:
        try:
            return pl.BlockSpec(shape, index_map, pipeline_mode=pl.Buffered(buffers))
        except TypeError:
            pass
    return pl.BlockSpec(shape, index_map)


def _call_with_fallback(build, *args):
    """build(use_buffered) -> pallas_call callable; retry without pl.Buffered on failure."""
    global _BUFFERED_OK
    if _BUFFERED_OK:
        try:
            return build(True)(*args)
        except Exception:
            _BUFFERED_OK = False
    return build(False)(*args)


def _plan(n, n_rel, fi_pad, fo_pad, cls_pad, vmem_limit):
    """Pick (dst_tile, n_pad, aew_buffer_count) from an explicit per-call VMEM budget."""
    n8 = _round_up(n, 8)
    aew_bufs = 3 if vmem_limit >= 80 * 1024 * 1024 else 2   # deeper buffering on 128-MiB parts

    def fits(tile, n_pad):
        xw_res = 2 * n_rel * n_pad * fo_pad * 2            # resident XW (budget as 2x: safe)
        aew = aew_bufs * tile * n_pad * 2                   # streamed bf16 adjacency tiles
        acc = tile * fo_pad * 4                             # f32 accumulator scratch
        outb = 2 * tile * max(fo_pad, cls_pad) * 4          # output double-buffer
        h_in = 2 * tile * max(fi_pad, fo_pad) * 2           # H tiles (XW kernel)
        head = 2 * fo_pad * cls_pad * 2                     # classifier weights
        misc = 4 * 1024 * 1024
        return xw_res + aew + acc + outb + h_in + head + misc <= vmem_limit

    def pick(max_overhead):
        for tile in (1024, 512, 256, 128, 64, 32, 16, 8):
            if tile > n8:
                continue
            n_pad = _round_up(n8, tile)
            if n_pad > max_overhead * n8:
                continue
            if n_pad // tile < 2 and n8 > 8:
                continue   # >= 2 dst tiles so the parallel axis splits across v7x's 2 TCs
            if fits(tile, n_pad):
                return tile, n_pad
        return None

    for overhead in (1.25, 2.0, float("inf")):
        got = pick(overhead)
        if got is not None:
            return got[0], got[1], aew_bufs
    return 8, n8, 2


# -----------------------------------------------------------------------------
# Kernel 1: per-relation feature transform, one wide MXU pass per node tile:
#   XW[r] = (H @ concat_r(W_r))[:, r*Fo:(r+1)*Fo]
# -----------------------------------------------------------------------------
def _xw_kernel(h_ref, w_ref, xw_ref):
    xw = jnp.dot(h_ref[...], w_ref[...], preferred_element_type=jnp.float32)
    r_count, _, fo = xw_ref.shape
    for r in range(r_count):                    # static unroll over relations
        xw_ref[r] = xw[:, r * fo:(r + 1) * fo].astype(xw_ref.dtype)


def compute_xw(h, w_flat, n_rel, *, tile, vmem_limit):
    """h: [N, Fi] bf16, w_flat: [Fi, R*Fo] bf16 -> XW [R, N, Fo] bf16."""
    N, Fi = h.shape
    Fo = w_flat.shape[1] // n_rel
    nt = N // tile

    def build(use_buf):
        return pl.pallas_call(
            _xw_kernel,
            out_shape=jax.ShapeDtypeStruct((n_rel, N, Fo), jnp.bfloat16),
            grid_spec=pltpu.PrefetchScalarGridSpec(
                num_scalar_prefetch=0,
                grid=(nt,),
                in_specs=[
                    pl.BlockSpec((tile, Fi), lambda t: (t, 0)),
                    _spec((Fi, n_rel * Fo), lambda t: (0, 0),
                          buffers=1, use_buffered=use_buf),
                ],
                out_specs=pl.BlockSpec((n_rel, tile, Fo), lambda t: (0, t, 0)),
            ),
            compiler_params=pltpu.CompilerParams(
                dimension_semantics=("parallel",),
                vmem_limit_bytes=vmem_limit),
        )

    return _call_with_fallback(build, h, w_flat)


# -----------------------------------------------------------------------------
# Kernel 2: one HeteroGraphConv layer (sum over relations + bias + ReLU),
# optionally with the classifier head fused into the finalize step.
# grid = (num_dst_tiles [parallel], R [arbitrary, innermost reduction]).
# -----------------------------------------------------------------------------
def _accumulate(aew_ref, xw_ref, acc_ref, r):
    @pl.when(r == 0)
    def _():
        acc_ref[...] = jnp.zeros_like(acc_ref)

    # Degree norms are already folded into aew => pure MXU matmul + f32 accumulate.
    acc_ref[...] += jnp.dot(aew_ref[0], xw_ref[r], preferred_element_type=jnp.float32)


def _layer_kernel(aew_ref, xw_ref, bsum_ref, o_ref, acc_ref):
    r = pl.program_id(1)
    _accumulate(aew_ref, xw_ref, acc_ref, r)

    @pl.when(r == pl.num_programs(1) - 1)
    def _():
        o_ref[...] = jnp.maximum(acc_ref[...] + bsum_ref[...], 0.0).astype(o_ref.dtype)


def _layer_head_kernel(aew_ref, xw_ref, bsum_ref, wclf_ref, bclf_ref, o_ref, acc_ref):
    r = pl.program_id(1)
    _accumulate(aew_ref, xw_ref, acc_ref, r)

    @pl.when(r == pl.num_programs(1) - 1)
    def _():
        h = jnp.maximum(acc_ref[...] + bsum_ref[...], 0.0).astype(jnp.bfloat16)
        # clf = Dropout -> ReLU -> Linear; the ReLU is a no-op because h >= 0.
        o_ref[...] = (jnp.dot(h, wclf_ref[...], preferred_element_type=jnp.float32)
                      + bclf_ref[...]).astype(o_ref.dtype)


def hetero_conv_layer(aew, xw, b_sum, *, tile, aew_bufs, vmem_limit,
                      head_w=None, head_b=None):
    """aew: [R, N, N] bf16 (degree-normalized adj*edge_weight), xw: [R, N, Fo] bf16,
    b_sum: [1, Fo] f32 (= sum_r b_r).  Returns ReLU(sum_r ...) [N, Fo] bf16, or
    fused-head logits [N, C] f32 when head weights are given."""
    R, N, _ = aew.shape
    Fo = xw.shape[2]
    nd = N // tile
    fuse_head = head_w is not None

    def build(use_buf):
        in_specs = [
            _spec((1, tile, N), lambda d, r: (r, d, 0),        # streamed A_hat_r tile
                  buffers=aew_bufs, use_buffered=use_buf),
            _spec((R, N, Fo), lambda d, r: (0, 0, 0),          # XW: VMEM-resident, invariant
                  buffers=1, use_buffered=use_buf),
            _spec((1, Fo), lambda d, r: (0, 0),                # sum_r b_r
                  buffers=1, use_buffered=use_buf),
        ]
        if fuse_head:
            C = head_w.shape[1]
            in_specs += [
                _spec((Fo, C), lambda d, r: (0, 0), buffers=1, use_buffered=use_buf),
                _spec((1, C), lambda d, r: (0, 0), buffers=1, use_buffered=use_buf),
            ]
            kernel = _layer_head_kernel
            out_shape = jax.ShapeDtypeStruct((N, C), jnp.float32)
            out_spec = pl.BlockSpec((tile, C), lambda d, r: (d, 0))
        else:
            kernel = _layer_kernel
            out_shape = jax.ShapeDtypeStruct((N, Fo), jnp.bfloat16)
            out_spec = pl.BlockSpec((tile, Fo), lambda d, r: (d, 0))

        return pl.pallas_call(
            kernel,
            out_shape=out_shape,
            grid_spec=pltpu.PrefetchScalarGridSpec(
                num_scalar_prefetch=0,
                grid=(nd, R),
                in_specs=in_specs,
                out_specs=out_spec,
                scratch_shapes=[pltpu.VMEM((tile, Fo), jnp.float32)],
            ),
            compiler_params=pltpu.CompilerParams(
                dimension_semantics=("parallel", "arbitrary"),
                vmem_limit_bytes=vmem_limit),
        )

    args = [aew, xw, b_sum] + ([head_w, head_b] if fuse_head else [])
    return _call_with_fallback(build, *args)


# -----------------------------------------------------------------------------
# Full forward pass (glue in plain JAX: degree folding, padding, layer loop).
# -----------------------------------------------------------------------------
def rgcn_forward(x, adj, edge_weight, conv_weights, conv_biases, w_clf, b_clf):
    """x: [N, in_feat] f32; adj, edge_weight: [R, N, N] f32;
       conv_weights[l]: [R, Fi_l, Fo_l]; conv_biases[l]: [R, 1, Fo_l];
       w_clf: [hidden, n_classes]; b_clf: [1, n_classes]  ->  logits [N, n_classes]."""
    N, in_feat = x.shape
    R = adj.shape[0]
    n_classes = w_clf.shape[1]
    n_layers = len(conv_weights)
    assert n_layers >= 1

    hidden_pads = [_round_up(w.shape[2], LANE) for w in conv_weights]
    fo_pad_max = max(hidden_pads)
    fi_pad0 = _round_up(in_feat, LANE)
    cls_pad = _round_up(n_classes, LANE)

    vmem_limit = _vmem_limit_bytes()
    tile, n_pad, aew_bufs = _plan(N, R, max(fi_pad0, fo_pad_max), fo_pad_max,
                                  cls_pad, vmem_limit)

    # DGL GraphConv(norm='both') + edge_weight: symmetric norm from the UNWEIGHTED
    # degrees (clamped >= 1); edge_weight scales messages. Both degree norms are folded
    # directly into the single bf16 adjacency tensor (no extra memory, fewer VPU ops).
    din = jax.lax.rsqrt(jnp.clip(jnp.sum(adj, axis=2, keepdims=True), 1.0, None))   # [R,N,1] dst
    dout = jax.lax.rsqrt(jnp.clip(jnp.sum(adj, axis=1, keepdims=True), 1.0, None))  # [R,1,N] src
    aew = (din * (adj * edge_weight) * dout).astype(jnp.bfloat16)                   # [R,N,N]

    if n_pad != N:
        p = n_pad - N
        aew = jnp.pad(aew, ((0, 0), (0, p), (0, p)))   # padded rows/cols stay zero
        x = jnp.pad(x, ((0, p), (0, 0)))

    # TODO(synk): nn.Dropout layers are identity in eval mode and are omitted.
    h = _pad_last(x, fi_pad0).astype(jnp.bfloat16)

    logits = None
    for l, (w, b) in enumerate(zip(conv_weights, conv_biases)):
        fi, fo = w.shape[1], w.shape[2]
        fi_pad = h.shape[1]
        fo_pad = hidden_pads[l]
        # [R, Fi, Fo] -> [Fi_pad, R*Fo_pad]: one wide MXU pass computes all relations' H @ W_r.
        w_p = jnp.pad(w, ((0, 0), (0, fi_pad - fi), (0, fo_pad - fo)))
        w_flat = jnp.transpose(w_p, (1, 0, 2)).reshape(fi_pad, R * fo_pad).astype(jnp.bfloat16)
        b_sum = _pad_last(jnp.sum(b, axis=0), fo_pad)                       # [1, fo_pad] f32

        xw = compute_xw(h, w_flat, R, tile=tile, vmem_limit=vmem_limit)     # [R, n_pad, fo_pad]

        if l == n_layers - 1:
            w_clf_p = jnp.pad(w_clf, ((0, fo_pad - w_clf.shape[0]),
                                      (0, cls_pad - n_classes))).astype(jnp.bfloat16)
            b_clf_p = _pad_last(b_clf, cls_pad)
            out = hetero_conv_layer(aew, xw, b_sum, tile=tile, aew_bufs=aew_bufs,
                                    vmem_limit=vmem_limit,
                                    head_w=w_clf_p, head_b=b_clf_p)
            logits = out[:N, :n_classes]
        else:
            h = hetero_conv_layer(aew, xw, b_sum, tile=tile, aew_bufs=aew_bufs,
                                  vmem_limit=vmem_limit)
    return logits


# -----------------------------------------------------------------------------
# Pure-JAX reference (f32) for a correctness sanity check.
# -----------------------------------------------------------------------------
def rgcn_reference(x, adj, edge_weight, conv_weights, conv_biases, w_clf, b_clf):
    deg_in = jnp.clip(jnp.sum(adj, axis=2, keepdims=True), 1.0, None)
    deg_out = jnp.clip(jnp.sum(adj, axis=1, keepdims=True), 1.0, None)
    a_hat = adj * edge_weight * jax.lax.rsqrt(deg_in) * jax.lax.rsqrt(deg_out)
    h = x
    for w, b in zip(conv_weights, conv_biases):
        out = jnp.zeros((x.shape[0], w.shape[2]), jnp.float32)
        for r in range(adj.shape[0]):
            out = out + a_hat[r] @ (h @ w[r]) + b[r]
        h = jax.nn.relu(out)
    return jax.nn.relu(h) @ w_clf + b_clf


# -----------------------------------------------------------------------------
if __name__ == "__main__":
    N = 64          # number of nodes
    IN_FEAT = 32
    HIDDEN = 32
    N_CLASSES = 8
    R = 3           # len(rel_names)

    key = jax.random.PRNGKey(0)
    keys = jax.random.split(key, 10)

    x = jax.random.normal(keys[0], (N, IN_FEAT), dtype=jnp.float32)
    adj = (jax.random.uniform(keys[1], (R, N, N)) < 0.3).astype(jnp.float32)
    edge_weight = jax.random.uniform(
        keys[2], (R, N, N), minval=0.5, maxval=1.5, dtype=jnp.float32)

    conv_weights = [
        0.1 * jax.random.normal(keys[3], (R, IN_FEAT, HIDDEN), dtype=jnp.float32),
        0.1 * jax.random.normal(keys[4], (R, HIDDEN, HIDDEN), dtype=jnp.float32),
    ]
    conv_biases = [
        0.01 * jax.random.normal(keys[5], (R, 1, HIDDEN), dtype=jnp.float32),
        0.01 * jax.random.normal(keys[6], (R, 1, HIDDEN), dtype=jnp.float32),
    ]
    w_clf = 0.1 * jax.random.normal(keys[7], (HIDDEN, N_CLASSES), dtype=jnp.float32)
    b_clf = 0.01 * jax.random.normal(keys[8], (1, N_CLASSES), dtype=jnp.float32)

    logits = rgcn_forward(
        x, adj, edge_weight, conv_weights, conv_biases, w_clf, b_clf)
    jax.block_until_ready(logits)
    assert logits.shape == (N, N_CLASSES), logits.shape

    # sanity check against the f32 reference (bf16 adjacency/XW => ~1e-3 level deviation)
    ref = rgcn_reference(
        x, adj, edge_weight, conv_weights, conv_biases, w_clf, b_clf)
    err = float(jnp.max(jnp.abs(logits - ref)))
    tol = 1e-2 + 3e-2 * float(jnp.max(jnp.abs(ref)))
    assert err <= tol, (err, tol)

    print("KERNEL_OK")
</pallas_src>

<mosaic_0001>
module attributes {stable_mosaic.version = 11 : i64} {
  func.func @_xw_kernel(%arg0: i32, %arg1: memref<32x128xbf16, #tpu.memory_space<vmem>>, %arg2: memref<128x384xbf16, #tpu.memory_space<vmem>>, %arg3: memref<3x32x128xbf16, #tpu.memory_space<vmem>>) attributes {dimension_semantics = [#tpu.dimension_semantics<parallel>], iteration_bounds = array<i64: 2>, scalar_prefetch = 0 : i64, scratch_operands = 0 : i64, tpu.core_type = #tpu.core_type<tc>, window_params = [{transform_indices = @transform_0, window_bounds = array<i64: 32, 128>}, {pipeline_mode = #tpu.pipeline_mode<synchronous>, transform_indices = @transform_1, window_bounds = array<i64: 128, 384>}, {transform_indices = @transform_2, window_bounds = array<i64: 3, 32, 128>}]} {
    %c0 = arith.constant 0 : index
    %c0_0 = arith.constant 0 : index
    %0 = vector.load %arg1[%c0, %c0_0] : memref<32x128xbf16, #tpu.memory_space<vmem>>, vector<32x128xbf16>
    %c0_1 = arith.constant 0 : index
    %c0_2 = arith.constant 0 : index
    %1 = vector.load %arg2[%c0_1, %c0_2] : memref<128x384xbf16, #tpu.memory_space<vmem>>, vector<128x384xbf16>
    %cst = arith.constant dense<0.000000e+00> : vector<32x384xf32>
    %2 = tpu.matmul %0, %1, %cst {dimension_numbers = #tpu.dot_dimension_numbers<[1], [0], [0], [1], [0, 0, 1, 1], [], []>} : vector<32x128xbf16>, vector<128x384xbf16>, vector<32x384xf32> -> vector<32x384xf32>
    %3 = vector.extract_strided_slice %2 {offsets = [0, 0], sizes = [32, 128], strides = [1, 1]} : vector<32x384xf32> to vector<32x128xf32>
    %4 = arith.truncf %3 : vector<32x128xf32> to vector<32x128xbf16>
    %c0_3 = arith.constant 0 : index
    %c0_4 = arith.constant 0 : index
    %c0_5 = arith.constant 0 : index
    %5 = vector.load %arg3[%c0_3, %c0_4, %c0_5] : memref<3x32x128xbf16, #tpu.memory_space<vmem>>, vector<1x32x128xbf16>
    %6 = vector.shape_cast %5 : vector<1x32x128xbf16> to vector<32x128xbf16>
    %7 = vector.shape_cast %4 : vector<32x128xbf16> to vector<1x32x128xbf16>
    tpu.vector_store %arg3[%c0_3, %c0_4, %c0_5], %7 {strides = array<i32>} : memref<3x32x128xbf16, #tpu.memory_space<vmem>>, vector<1x32x128xbf16>,
    %8 = vector.extract_strided_slice %2 {offsets = [0, 128], sizes = [32, 128], strides = [1, 1]} : vector<32x384xf32> to vector<32x128xf32>
    %9 = arith.truncf %8 : vector<32x128xf32> to vector<32x128xbf16>
    %c1 = arith.constant 1 : index
    %c0_6 = arith.constant 0 : index
    %c0_7 = arith.constant 0 : index
    %10 = vector.load %arg3[%c1, %c0_6, %c0_7] : memref<3x32x128xbf16, #tpu.memory_space<vmem>>, vector<1x32x128xbf16>
    %11 = vector.shape_cast %10 : vector<1x32x128xbf16> to vector<32x128xbf16>
    %12 = vector.shape_cast %9 : vector<32x128xbf16> to vector<1x32x128xbf16>
    tpu.vector_store %arg3[%c1, %c0_6, %c0_7], %12 {strides = array<i32>} : memref<3x32x128xbf16, #tpu.memory_space<vmem>>, vector<1x32x128xbf16>,
    %13 = vector.extract_strided_slice %2 {offsets = [0, 256], sizes = [32, 128], strides = [1, 1]} : vector<32x384xf32> to vector<32x128xf32>
    %14 = arith.truncf %13 : vector<32x128xf32> to vector<32x128xbf16>
    %c2 = arith.constant 2 : index
    %c0_8 = arith.constant 0 : index
    %c0_9 = arith.constant 0 : index
    %15 = vector.load %arg3[%c2, %c0_8, %c0_9] : memref<3x32x128xbf16, #tpu.memory_space<vmem>>, vector<1x32x128xbf16>
    %16 = vector.shape_cast %15 : vector<1x32x128xbf16> to vector<32x128xbf16>
    %17 = vector.shape_cast %14 : vector<32x128xbf16> to vector<1x32x128xbf16>
    tpu.vector_store %arg3[%c2, %c0_8, %c0_9], %17 {strides = array<i32>} : memref<3x32x128xbf16, #tpu.memory_space<vmem>>, vector<1x32x128xbf16>,
    return
  }
  func.func @transform_0(%arg0: i32) -> (i32, i32) {
    %c0_i32 = arith.constant 0 : i32
    %c0_i32_0 = arith.constant 0 : i32
    return %arg0, %c0_i32 : i32, i32
  }
  func.func @transform_1(%arg0: i32) -> (i32, i32) {
    %c0_i32 = arith.constant 0 : i32
    %c0_i32_0 = arith.constant 0 : i32
    %c0_i32_1 = arith.constant 0 : i32
    return %c0_i32, %c0_i32_0 : i32, i32
  }
  func.func @transform_2(%arg0: i32) -> (i32, i32, i32) {
    %c0_i32 = arith.constant 0 : i32
    %c0_i32_0 = arith.constant 0 : i32
    %c0_i32_1 = arith.constant 0 : i32
    return %c0_i32, %arg0, %c0_i32_0 : i32, i32, i32
  }
}

module attributes {stable_mosaic.version = 11 : i64} {
  func.func @_xw_kernel(%arg0: i32, %arg1: memref<32x128xbf16, #tpu.memory_space<vmem>>, %arg2: memref<128x384xbf16, #tpu.memory_space<vmem>>, %arg3: memref<3x32x128xbf16, #tpu.memory_space<vmem>>) attributes {dimension_semantics = [#tpu.dimension_semantics<parallel>], iteration_bounds = array<i64: 2>, scalar_prefetch = 0 : i64, scratch_operands = 0 : i64, tpu.core_type = #tpu.core_type<tc>, window_params = [{transform_indices = @transform_0, window_bounds = array<i64: 32, 128>}, {pipeline_mode = #tpu.pipeline_mode<synchronous>, transform_indices = @transform_1, window_bounds = array<i64: 128, 384>}, {transform_indices = @transform_2, window_bounds = array<i64: 3, 32, 128>}]} {
    %c0 = arith.constant 0 : index
    %c0_0 = arith.constant 0 : index
    %0 = vector.load %arg1[%c0, %c0_0] : memref<32x128xbf16, #tpu.memory_space<vmem>>, vector<32x128xbf16>
    %c0_1 = arith.constant 0 : index
    %c0_2 = arith.constant 0 : index
    %1 = vector.load %arg2[%c0_1, %c0_2] : memref<128x384xbf16, #tpu.memory_space<vmem>>, vector<128x384xbf16>
    %cst = arith.constant dense<0.000000e+00> : vector<32x384xf32>
    %2 = tpu.matmul %0, %1, %cst {dimension_numbers = #tpu.dot_dimension_numbers<[1], [0], [0], [1], [0, 0, 1, 1], [], []>} : vector<32x128xbf16>, vector<128x384xbf16>, vector<32x384xf32> -> vector<32x384xf32>
    %3 = vector.extract_strided_slice %2 {offsets = [0, 0], sizes = [32, 128], strides = [1, 1]} : vector<32x384xf32> to vector<32x128xf32>
    %4 = arith.truncf %3 : vector<32x128xf32> to vector<32x128xbf16>
    %c0_3 = arith.constant 0 : index
    %c0_4 = arith.constant 0 : index
    %c0_5 = arith.constant 0 : index
    %5 = vector.load %arg3[%c0_3, %c0_4, %c0_5] : memref<3x32x128xbf16, #tpu.memory_space<vmem>>, vector<1x32x128xbf16>
    %6 = vector.shape_cast %5 : vector<1x32x128xbf16> to vector<32x128xbf16>
    %7 = vector.shape_cast %4 : vector<32x128xbf16> to vector<1x32x128xbf16>
    tpu.vector_store %arg3[%c0_3, %c0_4, %c0_5], %7 {strides = array<i32>} : memref<3x32x128xbf16, #tpu.memory_space<vmem>>, vector<1x32x128xbf16>,
    %8 = vector.extract_strided_slice %2 {offsets = [0, 128], sizes = [32, 128], strides = [1, 1]} : vector<32x384xf32> to vector<32x128xf32>
    %9 = arith.truncf %8 : vector<32x128xf32> to vector<32x128xbf16>
    %c1 = arith.constant 1 : index
    %c0_6 = arith.constant 0 : index
    %c0_7 = arith.constant 0 : index
    %10 = vector.load %arg3[%c1, %c0_6, %c0_7] : memref<3x32x128xbf16, #tpu.memory_space<vmem>>, vector<1x32x128xbf16>
    %11 = vector.shape_cast %10 : vector<1x32x128xbf16> to vector<32x128xbf16>
    %12 = vector.shape_cast %9 : vector<32x128xbf16> to vector<1x32x128xbf16>
    tpu.vector_store %arg3[%c1, %c0_6, %c0_7], %12 {strides = array<i32>} : memref<3x32x128xbf16, #tpu.memory_space<vmem>>, vector<1x32x128xbf16>,
    %13 = vector.extract_strided_slice %2 {offsets = [0, 256], sizes = [32, 128], strides = [1, 1]} : vector<32x384xf32> to vector<32x128xf32>
    %14 = arith.truncf %13 : vector<32x128xf32> to vector<32x128xbf16>
    %c2 = arith.constant 2 : index
    %c0_8 = arith.constant 0 : index
    %c0_9 = arith.constant 0 : index
    %15 = vector.load %arg3[%c2, %c0_8, %c0_9] : memref<3x32x128xbf16, #tpu.memory_space<vmem>>, vector<1x32x128xbf16>
    %16 = vector.shape_cast %15 : vector<1x32x128xbf16> to vector<32x128xbf16>
    %17 = vector.shape_cast %14 : vector<32x128xbf16> to vector<1x32x128xbf16>
    tpu.vector_store %arg3[%c2, %c0_8, %c0_9], %17 {strides = array<i32>} : memref<3x32x128xbf16, #tpu.memory_space<vmem>>, vector<1x32x128xbf16>,
    return
  }
  func.func @transform_0(%arg0: i32) -> (i32, i32) {
    %c0_i32 = arith.constant 0 : i32
    %c0_i32_0 = arith.constant 0 : i32
    return %arg0, %c0_i32 : i32, i32
  }
  func.func @transform_1(%arg0: i32) -> (i32, i32) {
    %c0_i32 = arith.constant 0 : i32
    %c0_i32_0 = arith.constant 0 : i32
    %c0_i32_1 = arith.constant 0 : i32
    return %c0_i32, %c0_i32_0 : i32, i32
  }
  func.func @transform_2(%arg0: i32) -> (i32, i32, i32) {
    %c0_i32 = arith.constant 0 : i32
    %c0_i32_0 = arith.constant 0 : i32
    %c0_i32_1 = arith.constant 0 : i32
    return %c0_i32, %arg0, %c0_i32_0 : i32, i32, i32
  }
}

</mosaic_0001>

<llo_original>
// kernel: tpu_custom_call.1
$region0: #{tpu_custom_call.1}
  #allocation0 [shape = 'u32[]', space=smem, size = 0x4, offset = 0x4, fixed_abs, tag = 'smem constant byte address 0x4 - core index']
  #allocation1 [shape = 'u32[144,128]{1,0:T(1,128)}', space=vmem, size = 0x12000, scoped, tag = 'internal scratch']
  #allocation8 [shape = 's32[]', space=sflag, size = 0x4, offset = 0, fixed_abs, tag = 'sflag constant byte address 0x0 - dummy sync flag']
  %s0 = inlined_call_operand.hbm [shape: bf16[64,128], index: 0, kind: input, shape index: {}]
  %s1 = inlined_call_operand.hbm [shape: bf16[128,384], index: 1, kind: input, shape index: {}]
  %s2 = inlined_call_operand.hbm [shape: bf16[3,64,128], index: 2, kind: output, shape index: {}]
  %s3 = sld [smem:[#allocation0]]
  $region49: #{tpu_custom_call.1} parent=0
    _
  %s5 = ssub.s32 1, %s3
  %s6 = scalar_select 0, %s5, %s3
  $region1: #{tpu_custom_call.1} parent=0
    #allocation2 [shape = 'u8[16384]{0}', space=vmem, size = 0x4000, scoped, tag = 'input window, operand 0']
    #allocation3 [shape = 's32[2]{0}', space=sflag, size = 0x8, scoped, tag = 'scoped memory for tpu_custom_call.1']
    #allocation4 [shape = 's32[2]{0}', space=sflag, size = 0x8, scoped, tag = 'scoped memory for tpu_custom_call.1']
    #allocation5 [shape = 'u8[98304]{0}', space=vmem, size = 0x18000, scoped, tag = 'input window, operand 1, single buffered']
    #allocation6 [shape = 's32[1]{0}', space=sflag, size = 0x4, scoped, tag = 'scoped memory for tpu_custom_call.1']
    #allocation7 [shape = 'u8[49152]{0}', space=vmem, size = 0xc000, scoped, tag = 'output window, operand 0']
    %7 = vsyncpa [#allocation3], 0
    %s8 = scalar_lea.sflag [#allocation3], 1
    %9 = vsyncpa %s8, 0
    %10 = vsyncpa [#allocation6], 0
    %11 = vsyncpa [#allocation4], 0
    %s12 = scalar_lea.sflag [#allocation4], 1
    %13 = vsyncpa %s12, 0
    loop: start=0, step=1, limit=4
    $region2: #{tpu_custom_call.1} parent=1 // loop_pre_header
      _
    $region3: #{tpu_custom_call.1} parent=1 // loop_header
      %s15 = sphi 0, %s19
      %p16 = scmp.ge.s32.totalorder %s15, 4
      %s25 = sphi 0, %s27
      %s28 = sphi 0, %s25
      %s29 = sphi 0, %s28
      %s45 = sphi 0, %s29
      %s49 = sphi 0, %s49
      %s51 = sphi 0, %s49
      %s52 = sphi 0, %s51
      %s66 = sphi 0, %s52
      %s72 = sphi 0, %s74
      %s75 = sphi 0, %s72
      %s76 = sphi 0, %s75
      %s92 = sphi 0, %s76
    $region4: #{tpu_custom_call.1} parent=1 // loop_header_branch
      %18 = sbr.rel (%p16) target = $region8
    $region5: #{tpu_custom_call.1} parent=1 // loop_body
      %s20 = ssub.s32 %s15, 1
      %s21 = ssub.s32 %s15, 2
      %s22 = sadd.s32 %s15, 1
      %s23 = ssub.s32 %s15, %s22
      %p24 = scmp.eq.s32.totalorder %s23, 0
      %s26 = sadd.s32 %s25, 1
      %s27 = scalar_select %p24, %s25, %s26
      %p30 = pneg %p24
      %p31 = scmp.eq.s32.totalorder %s15, 1
      %p32 = por %p30, %p31
      %p33 = scmp.ne.s32.totalorder %s25, %s28
      %p34 = scmp.eq.s32.totalorder %s15, 0
      %p35 = por %p33, %p34
      %p36 = scmp.ne.s32.totalorder %s25, %s28
      %p37 = scmp.eq.s32.totalorder %s20, 1
      %p38 = por %p36, %p37
      %p39 = scmp.ne.s32.totalorder %s28, %s29
      %p40 = scmp.eq.s32.totalorder %s20, 0
      %p41 = por %p39, %p40
      %p42 = scmp.ne.s32.totalorder %s28, %s29
      %p43 = scmp.eq.s32.totalorder %s21, 1
      %p44 = por %p42, %p43
      %p46 = scmp.ne.s32.totalorder %s29, %s45
      %p47 = scmp.eq.s32.totalorder %s21, 0
      %p48 = por %p46, %p47
      %s50 = sadd.s32 %s49, 1
      %p53 = scmp.eq.s32.totalorder %s15, 1
      %p54 = scmp.ne.s32.totalorder %s49, %s51
      %p55 = scmp.eq.s32.totalorder %s15, 0
      %p56 = por %p54, %p55
      %p57 = scmp.ne.s32.totalorder %s49, %s51
      %p58 = scmp.eq.s32.totalorder %s20, 1
      %p59 = por %p57, %p58
      %p60 = scmp.ne.s32.totalorder %s51, %s52
      %p61 = scmp.eq.s32.totalorder %s20, 0
      %p62 = por %p60, %p61
      %p63 = scmp.ne.s32.totalorder %s51, %s52
      %p64 = scmp.eq.s32.totalorder %s21, 1
      %p65 = por %p63, %p64
      %p67 = scmp.ne.s32.totalorder %s52, %s66
      %p68 = scmp.eq.s32.totalorder %s21, 0
      %p69 = por %p67, %p68
      %s70 = ssub.s32 %s15, %s22
      %p71 = scmp.eq.s32.totalorder %s70, 0
      %s73 = sadd.s32 %s72, 1
      %s74 = scalar_select %p71, %s72, %s73
      %p77 = pneg %p71
      %p78 = scmp.eq.s32.totalorder %s15, 1
      %p79 = por %p77, %p78
      %p80 = scmp.ne.s32.totalorder %s72, %s75
      %p81 = scmp.eq.s32.totalorder %s15, 0
      %p82 = por %p80, %p81
      %p83 = scmp.ne.s32.totalorder %s72, %s75
      %p84 = scmp.eq.s32.totalorder %s20, 1
      %p85 = por %p83, %p84
      %p86 = scmp.ne.s32.totalorder %s75, %s76
      %p87 = scmp.eq.s32.totalorder %s20, 0
      %p88 = por %p86, %p87
      %p89 = scmp.ne.s32.totalorder %s75, %s76
      %p90 = scmp.eq.s32.totalorder %s21, 1
      %p91 = por %p89, %p90
      %p93 = scmp.ne.s32.totalorder %s76, %s92
      %p94 = scmp.eq.s32.totalorder %s21, 0
      %p95 = por %p93, %p94
      %p96 = scmp.le.s32.totalorder 1, %s15
      %p97 = scmp.lt.s32.totalorder %s15, 3
      %p98 = pnand %p96, %p97
      %p99 = pneg %p98
      // Predicated region
      $region9: #{tpu_custom_call.1} parent=5 // pred_check
        _
      $region10: #{tpu_custom_call.1} parent=5 // pred_check_branch
        %101 = sbr.rel (%p98) target = $region12
      $region11: #{tpu_custom_call.1} parent=5 // pred_region
        %s102 = ssub.s32 %s15, 1
        // Predicated region
        $region13: #{tpu_custom_call.1} parent=11 // pred_check
          %p103 = pneg %p62
        $region14: #{tpu_custom_call.1} parent=11 // pred_check_branch
          %105 = sbr.rel (%p103) target = $region16
        $region15: #{tpu_custom_call.1} parent=11 // pred_region
          %s107 = ssub.s32 3072, 3072
          %108 = vsyncadd [#allocation6], %s107
          %s109 = sshll.u32 [#allocation5], 4
          %s110 = int_to_ptr.vmem [resolvable:$true] %s109
          %115 = dma.hbm_to_vmem [thread:$0]  %s1, 3072, %s110, [#allocation6], 192, 192, 12
        $region16: #{tpu_custom_call.1} parent=11 // pred_fallthru
          _
      $region12: #{tpu_custom_call.1} parent=5 // pred_fallthru
        _
      %p116 = scmp.lt.s32.totalorder %s15, 2
      // Predicated region
      $region17: #{tpu_custom_call.1} parent=5 // pred_check
        %p117 = pneg %p116
      $region18: #{tpu_custom_call.1} parent=5 // pred_check_branch
        %119 = sbr.rel (%p117) target = $region20
      $region19: #{tpu_custom_call.1} parent=5 // pred_region
        // Predicated region
        $region21: #{tpu_custom_call.1} parent=19 // pred_check
          %p120 = pneg %p35
        $region22: #{tpu_custom_call.1} parent=19 // pred_check_branch
          %122 = sbr.rel (%p120) target = $region24
        $region23: #{tpu_custom_call.1} parent=19 // pred_region
          %s123 = sand.u32 %s25, 1
          %s124 = scalar_lea.sflag [#allocation3], %s123
          %s125 = sand.u32 %s25, 1
          %s126 = smul.addr %s125, 16
          %s127 = scalar_lea.vmem [#allocation2], %s126
          %s128 = smul.u32 4, %s15
          %s130 = ssub.s32 256, 256
          %131 = vsyncadd %s124, %s130
          %s132 = smul.addr %s128, 64
          %s133 = scalar_lea.hbm %s0, %s132
          %s134 = sshll.u32 %s127, 4
          %s135 = int_to_ptr.vmem [resolvable:$true] %s134
          %140 = dma.hbm_to_vmem [thread:$0]  %s133, 256, %s135, %s124, 64, 64, 4
        $region24: #{tpu_custom_call.1} parent=19 // pred_fallthru
          _
      $region20: #{tpu_custom_call.1} parent=5 // pred_fallthru
        _
      %p141 = scmp.le.s32.totalorder 1, %s15
      %p142 = scmp.lt.s32.totalorder %s15, 3
      %p143 = pnand %p141, %p142
      %p144 = pneg %p143
      // Predicated region
      $region25: #{tpu_custom_call.1} parent=5 // pred_check
        _
      $region26: #{tpu_custom_call.1} parent=5 // pred_check_branch
        %146 = sbr.rel (%p143) target = $region28
      $region27: #{tpu_custom_call.1} parent=5 // pred_region
        %s147 = ssub.s32 %s15, 1
        %s148 = sand.u32 %s28, 1
        %s149 = scalar_lea.sflag [#allocation3], %s148
        %s150 = sand.u32 %s28, 1
        %s151 = smul.addr %s150, 16
        %s152 = scalar_lea.vmem [#allocation2], %s151
        // Predicated region
        $region29: #{tpu_custom_call.1} parent=27 // pred_check
          %p153 = pneg %p41
        $region30: #{tpu_custom_call.1} parent=27 // pred_check_branch
          %155 = sbr.rel (%p153) target = $region32
        $region31: #{tpu_custom_call.1} parent=27 // pred_region
          %156 = dma.done %s149, 256
        $region32: #{tpu_custom_call.1} parent=27 // pred_fallthru
          _
        // Predicated region
        $region33: #{tpu_custom_call.1} parent=27 // pred_check
          %p157 = pneg %p62
        $region34: #{tpu_custom_call.1} parent=27 // pred_check_branch
          %159 = sbr.rel (%p157) target = $region36
        $region35: #{tpu_custom_call.1} parent=27 // pred_region
          %160 = dma.done [#allocation6], 3072
        $region36: #{tpu_custom_call.1} parent=27 // pred_fallthru
          _
        %s161 = sand.u32 %s28, 1
        %s162 = scalar_lea.sflag [#allocation3], %s161
        %s163 = sand.u32 %s28, 1
        %s164 = smul.addr %s163, 16
        %s165 = scalar_lea.vmem [#allocation2], %s164
        %p166 = pneg %p41
        %p167 = pneg %p38
        %p168 = pneg %p62
        %p169 = pneg %p59
        %p170 = pneg %p88
        %p171 = pneg %p85
        %s172 = sand.u32 %s75, 1
        %s173 = scalar_lea.sflag [#allocation4], %s172
        %s174 = sand.u32 %s75, 1
        %s175 = smul.addr %s174, 48
        %s176 = scalar_lea.vmem [#allocation7], %s175
        %s177 = smul.u32 4, %s20
        %s178 = smul.u32 4, %s20
        %v180 = vld [vmem:[%s152] sm:$0xf]
        %v181 = vld [vmem:[%s152 + $0x4] sm:$0xf]
        %v182 = vld [vmem:[%s152 + $0x8] sm:$0xf]
        %v183 = vld [vmem:[%s152 + $0xc] sm:$0xf]
        %v184 = vld [vmem:[#allocation5] sm:$0xff]
        %v185 = vld [vmem:[#allocation5 + $0x8] sm:$0xf]
        %v186 = vld [vmem:[#allocation5 + $0xc] sm:$0xff]
        %v187 = vld [vmem:[#allocation5 + $0x14] sm:$0xf]
        %v188 = vld [vmem:[#allocation5 + $0x18] sm:$0xff]
        %v189 = vld [vmem:[#allocation5 + $0x20] sm:$0xf]
        %v190 = vld [vmem:[#allocation5 + $0x24] sm:$0xff]
        %v191 = vld [vmem:[#allocation5 + $0x2c] sm:$0xf]
        %v192 = vld [vmem:[#allocation5 + $0x30] sm:$0xff]
        %v193 = vld [vmem:[#allocation5 + $0x38] sm:$0xf]
        %v194 = vld [vmem:[#allocation5 + $0x3c] sm:$0xff]
        %v195 = vld [vmem:[#allocation5 + $0x44] sm:$0xf]
        %v196 = vld [vmem:[#allocation5 + $0x48] sm:$0xff]
        %v197 = vld [vmem:[#allocation5 + $0x50] sm:$0xf]
        %v198 = vld [vmem:[#allocation5 + $0x54] sm:$0xff]
        %v199 = vld [vmem:[#allocation5 + $0x5c] sm:$0xf]
        %v200 = vld [vmem:[#allocation5 + $0x60] sm:$0xff]
        %v201 = vld [vmem:[#allocation5 + $0x68] sm:$0xf]
        %v202 = vld [vmem:[#allocation5 + $0x6c] sm:$0xff]
        %v203 = vld [vmem:[#allocation5 + $0x74] sm:$0xf]
        %v204 = vld [vmem:[#allocation5 + $0x78] sm:$0xff]
        %v205 = vld [vmem:[#allocation5 + $0x80] sm:$0xf]
        %v206 = vld [vmem:[#allocation5 + $0x84] sm:$0xff]
        %v207 = vld [vmem:[#allocation5 + $0x8c] sm:$0xf]
        %v208 = vld [vmem:[#allocation5 + $0x90] sm:$0xff]
        %v209 = vld [vmem:[#allocation5 + $0x98] sm:$0xf]
        %v210 = vld [vmem:[#allocation5 + $0x9c] sm:$0xff]
        %v211 = vld [vmem:[#allocation5 + $0xa4] sm:$0xf]
        %v212 = vld [vmem:[#allocation5 + $0xa8] sm:$0xff]
        %v213 = vld [vmem:[#allocation5 + $0xb0] sm:$0xf]
        %v214 = vld [vmem:[#allocation5 + $0xb4] sm:$0xff]
        %v215 = vld [vmem:[#allocation5 + $0xbc] sm:$0xf]
        %v220 = vunpack.c.l.b16 %v180
        %v221 = vunpack.c.l.b16 %v181
        %v222 = vunpack.c.l.b16 %v182
        %v223 = vunpack.c.l.b16 %v183
        %v224 = vpack.c.b16 %v221, %v220
        %v225 = vpack.c.b16 %v223, %v222
        %v260 = vunpack.c.l.b16 %v184
        %v261 = vunpack.c.h.b16 %v184
        %v262 = vunpack.c.l.b16 %v185
        %v263 = vunpack.c.l.b16 %v186
        %v264 = vunpack.c.h.b16 %v186
        %v265 = vunpack.c.l.b16 %v187
        %v266 = vunpack.c.l.b16 %v188
        %v267 = vunpack.c.h.b16 %v188
        %v268 = vunpack.c.l.b16 %v189
        %v269 = vunpack.c.l.b16 %v190
        %v270 = vunpack.c.h.b16 %v190
        %v271 = vunpack.c.l.b16 %v191
        %v272 = vunpack.c.l.b16 %v192
        %v273 = vunpack.c.h.b16 %v192
        %v274 = vunpack.c.l.b16 %v193
        %v275 = vunpack.c.l.b16 %v194
        %v276 = vunpack.c.h.b16 %v194
        %v277 = vunpack.c.l.b16 %v195
        %v278 = vunpack.c.l.b16 %v196
        %v279 = vunpack.c.h.b16 %v196
        %v280 = vunpack.c.l.b16 %v197
        %v281 = vunpack.c.l.b16 %v198
        %v282 = vunpack.c.h.b16 %v198
        %v283 = vunpack.c.l.b16 %v199
        %v284 = vunpack.c.l.b16 %v200
        %v285 = vunpack.c.h.b16 %v200
        %v286 = vunpack.c.l.b16 %v201
        %v287 = vunpack.c.l.b16 %v202
        %v288 = vunpack.c.h.b16 %v202
        %v289 = vunpack.c.l.b16 %v203
        %v290 = vunpack.c.l.b16 %v204
        %v291 = vunpack.c.h.b16 %v204
        %v292 = vunpack.c.l.b16 %v205
        %v293 = vunpack.c.l.b16 %v206
        %v294 = vunpack.c.h.b16 %v206
        %v295 = vunpack.c.l.b16 %v207
        %v296 = vunpack.c.l.b16 %v208
        %v297 = vunpack.c.h.b16 %v208
        %v298 = vunpack.c.l.b16 %v209
        %v299 = vunpack.c.l.b16 %v210
        %v300 = vunpack.c.h.b16 %v210
        %v301 = vunpack.c.l.b16 %v211
        %v302 = vunpack.c.l.b16 %v212
        %v303 = vunpack.c.h.b16 %v212
        %v304 = vunpack.c.l.b16 %v213
        %v305 = vunpack.c.l.b16 %v214
        %v306 = vunpack.c.h.b16 %v214
        %v307 = vunpack.c.l.b16 %v215
        %v308 = vpack.c.b16 %v263, %v260
        %v309 = vpack.c.b16 %v264, %v261
        %v310 = vpack.c.b16 %v265, %v262
        %v311 = vpack.c.b16 %v269, %v266
        %v312 = vpack.c.b16 %v270, %v267
        %v313 = vpack.c.b16 %v271, %v268
        %v314 = vpack.c.b16 %v275, %v272
        %v315 = vpack.c.b16 %v276, %v273
        %v316 = vpack.c.b16 %v277, %v274
        %v317 = vpack.c.b16 %v281, %v278
        %v318 = vpack.c.b16 %v282, %v279
        %v319 = vpack.c.b16 %v283, %v280
        %v320 = vpack.c.b16 %v287, %v284
        %v321 = vpack.c.b16 %v288, %v285
        %v322 = vpack.c.b16 %v289, %v286
        %v323 = vpack.c.b16 %v293, %v290
        %v324 = vpack.c.b16 %v294, %v291
        %v325 = vpack.c.b16 %v295, %v292
        %v326 = vpack.c.b16 %v299, %v296
        %v327 = vpack.c.b16 %v300, %v297
        %v328 = vpack.c.b16 %v301, %v298
        %v329 = vpack.c.b16 %v305, %v302
        %v330 = vpack.c.b16 %v306, %v303
        %v331 = vpack.c.b16 %v307, %v304
        %356 = vmatprep.subr.bf16.mxu0 %v309
        %357 = vmatpush1.bf16.msra.mxu0 %v308
        %358 = vmatprep.subr.bf16.mxu0 %v312
        %359 = vmatpush1.bf16.msra.mxu0 %v311
        %360 = vmatprep.subr.bf16.mxu0 %v315
        %361 = vmatpush1.bf16.msra.mxu0 %v314
        %362 = vmatprep.subr.bf16.mxu0 %v318
        %363 = vmatpush1.bf16.msra.mxu0 %v317
        %364 = vmatprep.subr.bf16.mxu0 %v321
        %365 = vmatpush1.bf16.msra.mxu0 %v320
        %366 = vmatprep.subr.bf16.mxu0 %v324
        %367 = vmatpush1.bf16.msra.mxu0 %v323
        %368 = vmatprep.subr.bf16.mxu0 %v327
        %369 = vmatpush1.bf16.msra.mxu0 %v326
        %370 = vmatprep.subr.bf16.mxu0 %v330
        %371 = vmatpush1.bf16.msra.mxu0 %v329
        %372 = vmatprep.subr.bf16.mxu0 0
        %373 = vmatpush1.bf16.msra.mxu0 0
        %374 = vmatprep.subr.bf16.mxu0 0
        %375 = vmatpush1.bf16.msra.mxu0 0
        %376 = vmatprep.subr.bf16.mxu0 0
        %377 = vmatpush1.bf16.msra.mxu0 0
        %378 = vmatprep.subr.bf16.mxu0 0
        %379 = vmatpush1.bf16.msra.mxu0 0
        %380 = vmatprep.subr.bf16.mxu0 0
        %381 = vmatpush1.bf16.msra.mxu0 0
        %382 = vmatprep.subr.bf16.mxu0 0
        %383 = vmatpush1.bf16.msra.mxu0 0
        %384 = vmatprep.subr.bf16.mxu0 0
        %385 = vmatpush1.bf16.msra.mxu0 0
        %386 = vmatprep.subr.bf16.mxu0 0
        %387 = vmatpush1.bf16.msra.mxu0 0
        %388 = vmatprep.mubr.bf16.mxu0 0
        %389 = vmatmul.mubr.bf16.gmra.mrb[0].mxu0 %v224
        %v390 = vpop.f32.mrb[0].mxu0
        %v391 = vadd.f32 0.0, %v390
        %v392 = vpop.f32.mrb[0].mxu0
        %v393 = vadd.f32 0.0, %v392
        %v394 = vpop.f32.mrb[0].mxu0
        %v395 = vadd.f32 0.0, %v394
        %v396 = vpop.f32.mrb[0].mxu0
        %v397 = vadd.f32 0.0, %v396
        %398 = vmatprep.mubr.bf16.mxu0 0
        %399 = vmatmul.mubr.bf16.gmra.mrb[0].mxu0 %v225
        %v400 = vpop.f32.mrb[0].mxu0
        %v401 = vadd.f32 0.0, %v400
        %v402 = vpop.f32.mrb[0].mxu0
        %v403 = vadd.f32 0.0, %v402
        %v404 = vpop.f32.mrb[0].mxu0
        %v405 = vadd.f32 0.0, %v404
        %v406 = vpop.f32.mrb[0].mxu0
        %v407 = vadd.f32 0.0, %v406
        %408 = vdwg.mxu0
        %409 = vmatprep.subr.bf16.mxu0 0
        %410 = vmatpush1.bf16.msra.mxu0 %v310
        %411 = vmatprep.subr.bf16.mxu0 0
        %412 = vmatpush1.bf16.msra.mxu0 %v313
        %413 = vmatprep.subr.bf16.mxu0 0
        %414 = vmatpush1.bf16.msra.mxu0 %v316
        %415 = vmatprep.subr.bf16.mxu0 0
        %416 = vmatpush1.bf16.msra.mxu0 %v319
        %417 = vmatprep.subr.bf16.mxu0 0
        %418 = vmatpush1.bf16.msra.mxu0 %v322
        %419 = vmatprep.subr.bf16.mxu0 0
        %420 = vmatpush1.bf16.msra.mxu0 %v325
        %421 = vmatprep.subr.bf16.mxu0 0
        %422 = vmatpush1.bf16.msra.mxu0 %v328
        %423 = vmatprep.subr.bf16.mxu0 0
        %424 = vmatpush1.bf16.msra.mxu0 %v331
        %425 = vmatprep.subr.bf16.mxu0 0
        %426 = vmatpush1.bf16.msra.mxu0 0
        %427 = vmatprep.subr.bf16.mxu0 0
        %428 = vmatpush1.bf16.msra.mxu0 0
        %429 = vmatprep.subr.bf16.mxu0 0
        %430 = vmatpush1.bf16.msra.mxu0 0
        %431 = vmatprep.subr.bf16.mxu0 0
        %432 = vmatpush1.bf16.msra.mxu0 0
        %433 = vmatprep.subr.bf16.mxu0 0
        %434 = vmatpush1.bf16.msra.mxu0 0
        %435 = vmatprep.subr.bf16.mxu0 0
        %436 = vmatpush1.bf16.msra.mxu0 0
        %437 = vmatprep.subr.bf16.mxu0 0
        %438 = vmatpush1.bf16.msra.mxu0 0
        %439 = vmatprep.subr.bf16.mxu0 0
        %440 = vmatpush1.bf16.msra.mxu0 0
        %441 = vmatprep.mubr.bf16.mxu0 0
        %442 = vmatmul.mubr.bf16.gmra.mrb[0].mxu0 %v224
        %v443 = vpop.f32.mrb[0].mxu0
        %v444 = vadd.f32 0.0, %v443
        %v445 = vpop.f32.mrb[0].mxu0
        %v446 = vpop.f32.mrb[0].mxu0
        %v447 = vadd.f32 0.0, %v446
        %v448 = vpop.f32.mrb[0].mxu0
        %449 = vmatprep.mubr.bf16.mxu0 0
        %450 = vmatmul.mubr.bf16.gmra.mrb[0].mxu0 %v225
        %v451 = vpop.f32.mrb[0].mxu0
        %v452 = vadd.f32 0.0, %v451
        %v453 = vpop.f32.mrb[0].mxu0
        %v454 = vpop.f32.mrb[0].mxu0
        %v455 = vadd.f32 0.0, %v454
        %v456 = vpop.f32.mrb[0].mxu0
        %457 = vdwg.mxu0
        %v458 = vpack.c.bf16 %v395, %v391
        %v459 = vpack.c.bf16 %v405, %v401
        %v462 = vunpack.c.l.b16 %v458
        %v463 = vunpack.c.h.b16 %v458
        %v464 = vunpack.c.l.b16 %v459
        %v465 = vunpack.c.h.b16 %v459
        %v466 = vpack.c.b16 %v462, %v462
        %v467 = vpack.c.b16 %v463, %v463
        %v468 = vpack.c.b16 %v464, %v464
        %v469 = vpack.c.b16 %v465, %v465
        %474 = vst [vmem:[%s176] sm:$0xf] %v466
        %475 = vst [vmem:[%s176 + $0x4] sm:$0xf] %v467
        %476 = vst [vmem:[%s176 + $0x8] sm:$0xf] %v468
        %477 = vst [vmem:[%s176 + $0xc] sm:$0xf] %v469
        %v478 = vpack.c.bf16 %v397, %v393
        %v479 = vpack.c.bf16 %v407, %v403
        %v482 = vunpack.c.l.b16 %v478
        %v483 = vunpack.c.h.b16 %v478
        %v484 = vunpack.c.l.b16 %v479
        %v485 = vunpack.c.h.b16 %v479
        %v486 = vpack.c.b16 %v482, %v482
        %v487 = vpack.c.b16 %v483, %v483
        %v488 = vpack.c.b16 %v484, %v484
        %v489 = vpack.c.b16 %v485, %v485
        %s494 = scalar_lea.vmem %s176, 16 [#allocation7]
        %495 = vst [vmem:[%s494] sm:$0xf] %v486
        %496 = vst [vmem:[%s494 + $0x4] sm:$0xf] %v487
        %497 = vst [vmem:[%s494 + $0x8] sm:$0xf] %v488
        %498 = vst [vmem:[%s494 + $0xc] sm:$0xf] %v489
        %v499 = vpack.c.bf16 %v447, %v444
        %v500 = vpack.c.bf16 %v455, %v452
        %v503 = vunpack.c.l.b16 %v499
        %v504 = vunpack.c.h.b16 %v499
        %v505 = vunpack.c.l.b16 %v500
        %v506 = vunpack.c.h.b16 %v500
        %v507 = vpack.c.b16 %v503, %v503
        %v508 = vpack.c.b16 %v504, %v504
        %v509 = vpack.c.b16 %v505, %v505
        %v510 = vpack.c.b16 %v506, %v506
        %s515 = scalar_lea.vmem %s176, 32 [#allocation7]
        %516 = vst [vmem:[%s515] sm:$0xf] %v507
        %517 = vst [vmem:[%s515 + $0x4] sm:$0xf] %v508
        %518 = vst [vmem:[%s515 + $0x8] sm:$0xf] %v509
        %519 = vst [vmem:[%s515 + $0xc] sm:$0xf] %v510
        %s520 = sand.u32 %s75, 1
        %s521 = scalar_lea.sflag [#allocation4], %s520
        %s522 = sand.u32 %s75, 1
        %s523 = smul.addr %s522, 48
        %s524 = scalar_lea.vmem [#allocation7], %s523
        // Predicated region
        $region37: #{tpu_custom_call.1} parent=27 // pred_check
          %p525 = pneg %p85
        $region38: #{tpu_custom_call.1} parent=27 // pred_check_branch
          %527 = sbr.rel (%p525) target = $region40
        $region39: #{tpu_custom_call.1} parent=27 // pred_region
          #allocation9 [shape = 'u32[6]{0}', space=smem, size = 0x18, scoped, tag = 'DMA stride descriptor']
          %s528 = smul.u32 4, %s20
          %s530 = ssub.s32 768, 768
          %531 = vsyncadd %s521, %s530
          %s532 = smul.addr %s528, 64
          %s533 = scalar_lea.hbm %s2, %s532
          %s535 = sshll.u32 1, 14
          %s536 = sxor.u32 4294967295, %s535
          %s539 = sshll.u32 7, 18
          %s540 = sxor.u32 4294967295, %s539
          %s541 = sand.u32 0, %s540
          %s543 = sor.u32 %s541, 0
          %s545 = sshll.u32 3, 24
          %s546 = sxor.u32 4294967295, %s545
          %s547 = sand.u32 %s543, %s546
          %s549 = sor.u32 %s547, 0
          %s550 = sshll.u32 %s524, 4
          %s551 = int_to_ptr.vmem [resolvable:$true] %s550
          %557 = sst [smem:[#allocation9]] 256
          %s558 = scalar_lea.smem [#allocation9], 1
          %559 = sst [smem:[%s558]] 512
          %s560 = scalar_lea.smem [#allocation9], 2
          %561 = sst [smem:[%s560]] 4
          %s562 = scalar_lea.smem [#allocation9], 3
          %563 = sst [smem:[%s562]] 64
          %s564 = scalar_lea.smem [#allocation9], 4
          %565 = sst [smem:[%s564]] 64
          %s566 = scalar_lea.smem [#allocation9], 5
          %567 = sst [smem:[%s566]] 4
          %569 = dma.general %s551, 768, %s533, %s521, [#allocation8], [#allocation9], %s549, 0
        $region40: #{tpu_custom_call.1} parent=27 // pred_fallthru
          _
      $region28: #{tpu_custom_call.1} parent=5 // pred_fallthru
        _
      %p570 = scmp.le.s32.totalorder 2, %s15
      // Predicated region
      $region41: #{tpu_custom_call.1} parent=5 // pred_check
        %p571 = pneg %p570
      $region42: #{tpu_custom_call.1} parent=5 // pred_check_branch
        %573 = sbr.rel (%p571) target = $region44
      $region43: #{tpu_custom_call.1} parent=5 // pred_region
        %s574 = ssub.s32 %s15, 2
        // Predicated region
        $region45: #{tpu_custom_call.1} parent=43 // pred_check
          %p575 = pneg %p91
        $region46: #{tpu_custom_call.1} parent=43 // pred_check_branch
          %577 = sbr.rel (%p575) target = $region48
        $region47: #{tpu_custom_call.1} parent=43 // pred_region
          %s578 = sand.u32 %s76, 1
          %s579 = scalar_lea.sflag [#allocation4], %s578
          %s580 = sand.u32 %s76, 1
          %s581 = smul.addr %s580, 48
          %s582 = scalar_lea.vmem [#allocation7], %s581
          %583 = dma.done %s579, 768
        $region48: #{tpu_custom_call.1} parent=43 // pred_fallthru
          _
      $region44: #{tpu_custom_call.1} parent=5 // pred_fallthru
        _
    $region6: #{tpu_custom_call.1} parent=1 // loop_footer
      %s19 = sadd.s32 1, %s15
    $region7: #{tpu_custom_call.1} parent=1 // loop_footer_branch
      %14 = sbr.rel target = $region3
    $region8: #{tpu_custom_call.1} parent=1 // loop_exit
      _
    %584 = vsyncpa [#allocation3], 1
    %s585 = scalar_lea.sflag [#allocation3], 1
    %586 = vsyncpa %s585, 1
    %587 = vsyncpa [#allocation6], 1
    %588 = vsyncpa [#allocation4], 1
    %s589 = scalar_lea.sflag [#allocation4], 1
    %590 = vsyncpa %s589, 1

// kernel: tpu_custom_call.1
$region0: #{tpu_custom_call.1}
  #allocation0 [shape = 'u32[]', space=smem, size = 0x4, offset = 0x4, fixed_abs, tag = 'smem constant byte address 0x4 - core index']
  #allocation1 [shape = 'u32[144,128]{1,0:T(1,128)}', space=vmem, size = 0x12000, scoped, tag = 'internal scratch']
  #allocation8 [shape = 's32[]', space=sflag, size = 0x4, offset = 0, fixed_abs, tag = 'sflag constant byte address 0x0 - dummy sync flag']
  %s0 = inlined_call_operand.hbm [shape: bf16[64,128], index: 0, kind: input, shape index: {}]
  %s1 = inlined_call_operand.hbm [shape: bf16[128,384], index: 1, kind: input, shape index: {}]
  %s2 = inlined_call_operand.hbm [shape: bf16[3,64,128], index: 2, kind: output, shape index: {}]
  %s3 = sld [smem:[#allocation0]]
  $region49: #{tpu_custom_call.1} parent=0
    _
  %s5 = ssub.s32 1, %s3
  %s6 = scalar_select 0, %s5, %s3
  $region1: #{tpu_custom_call.1} parent=0
    #allocation2 [shape = 'u8[16384]{0}', space=vmem, size = 0x4000, scoped, tag = 'input window, operand 0']
    #allocation3 [shape = 's32[2]{0}', space=sflag, size = 0x8, scoped, tag = 'scoped memory for tpu_custom_call.1']
    #allocation4 [shape = 's32[2]{0}', space=sflag, size = 0x8, scoped, tag = 'scoped memory for tpu_custom_call.1']
    #allocation5 [shape = 'u8[98304]{0}', space=vmem, size = 0x18000, scoped, tag = 'input window, operand 1, single buffered']
    #allocation6 [shape = 's32[1]{0}', space=sflag, size = 0x4, scoped, tag = 'scoped memory for tpu_custom_call.1']
    #allocation7 [shape = 'u8[49152]{0}', space=vmem, size = 0xc000, scoped, tag = 'output window, operand 0']
    %7 = vsyncpa [#allocation3], 0
    %s8 = scalar_lea.sflag [#allocation3], 1
    %9 = vsyncpa %s8, 0
    %10 = vsyncpa [#allocation6], 0
    %11 = vsyncpa [#allocation4], 0
    %s12 = scalar_lea.sflag [#allocation4], 1
    %13 = vsyncpa %s12, 0
    loop: start=0, step=1, limit=4
    $region2: #{tpu_custom_call.1} parent=1 // loop_pre_header
      _
    $region3: #{tpu_custom_call.1} parent=1 // loop_header
      %s15 = sphi 0, %s19
      %p16 = scmp.ge.s32.totalorder %s15, 4
      %s25 = sphi 0, %s27
      %s28 = sphi 0, %s25
      %s29 = sphi 0, %s28
      %s45 = sphi 0, %s29
      %s49 = sphi 0, %s49
      %s51 = sphi 0, %s49
      %s52 = sphi 0, %s51
      %s66 = sphi 0, %s52
      %s72 = sphi 0, %s74
      %s75 = sphi 0, %s72
      %s76 = sphi 0, %s75
      %s92 = sphi 0, %s76
    $region4: #{tpu_custom_call.1} parent=1 // loop_header_branch
      %18 = sbr.rel (%p16) target = $region8
    $region5: #{tpu_custom_call.1} parent=1 // loop_body
      %s20 = ssub.s32 %s15, 1
      %s21 = ssub.s32 %s15, 2
      %s22 = sadd.s32 %s15, 1
      %s23 = ssub.s32 %s15, %s22
      %p24 = scmp.eq.s32.totalorder %s23, 0
      %s26 = sadd.s32 %s25, 1
      %s27 = scalar_select %p24, %s25, %s26
      %p30 = pneg %p24
      %p31 = scmp.eq.s32.totalorder %s15, 1
      %p32 = por %p30, %p31
      %p33 = scmp.ne.s32.totalorder %s25, %s28
      %p34 = scmp.eq.s32.totalorder %s15, 0
      %p35 = por %p33, %p34
      %p36 = scmp.ne.s32.totalorder %s25, %s28
      %p37 = scmp.eq.s32.totalorder %s20, 1
      %p38 = por %p36, %p37
      %p39 = scmp.ne.s32.totalorder %s28, %s29
      %p40 = scmp.eq.s32.totalorder %s20, 0
      %p41 = por %p39, %p40
      %p42 = scmp.ne.s32.totalorder %s28, %s29
      %p43 = scmp.eq.s32.totalorder %s21, 1
      %p44 = por %p42, %p43
      %p46 = scmp.ne.s32.totalorder %s29, %s45
      %p47 = scmp.eq.s32.totalorder %s21, 0
      %p48 = por %p46, %p47
      %s50 = sadd.s32 %s49, 1
      %p53 = scmp.eq.s32.totalorder %s15, 1
      %p54 = scmp.ne.s32.totalorder %s49, %s51
      %p55 = scmp.eq.s32.totalorder %s15, 0
      %p56 = por %p54, %p55
      %p57 = scmp.ne.s32.totalorder %s49, %s51
      %p58 = scmp.eq.s32.totalorder %s20, 1
      %p59 = por %p57, %p58
      %p60 = scmp.ne.s32.totalorder %s51, %s52
      %p61 = scmp.eq.s32.totalorder %s20, 0
      %p62 = por %p60, %p61
      %p63 = scmp.ne.s32.totalorder %s51, %s52
      %p64 = scmp.eq.s32.totalorder %s21, 1
      %p65 = por %p63, %p64
      %p67 = scmp.ne.s32.totalorder %s52, %s66
      %p68 = scmp.eq.s32.totalorder %s21, 0
      %p69 = por %p67, %p68
      %s70 = ssub.s32 %s15, %s22
      %p71 = scmp.eq.s32.totalorder %s70, 0
      %s73 = sadd.s32 %s72, 1
      %s74 = scalar_select %p71, %s72, %s73
      %p77 = pneg %p71
      %p78 = scmp.eq.s32.totalorder %s15, 1
      %p79 = por %p77, %p78
      %p80 = scmp.ne.s32.totalorder %s72, %s75
      %p81 = scmp.eq.s32.totalorder %s15, 0
      %p82 = por %p80, %p81
      %p83 = scmp.ne.s32.totalorder %s72, %s75
      %p84 = scmp.eq.s32.totalorder %s20, 1
      %p85 = por %p83, %p84
      %p86 = scmp.ne.s32.totalorder %s75, %s76
      %p87 = scmp.eq.s32.totalorder %s20, 0
      %p88 = por %p86, %p87
      %p89 = scmp.ne.s32.totalorder %s75, %s76
      %p90 = scmp.eq.s32.totalorder %s21, 1
      %p91 = por %p89, %p90
      %p93 = scmp.ne.s32.totalorder %s76, %s92
      %p94 = scmp.eq.s32.totalorder %s21, 0
      %p95 = por %p93, %p94
      %p96 = scmp.le.s32.totalorder 1, %s15
      %p97 = scmp.lt.s32.totalorder %s15, 3
      %p98 = pnand %p96, %p97
      %p99 = pneg %p98
      // Predicated region
      $region9: #{tpu_custom_call.1} parent=5 // pred_check
        _
      $region10: #{tpu_custom_call.1} parent=5 // pred_check_branch
        %101 = sbr.rel (%p98) target = $region12
      $region11: #{tpu_custom_call.1} parent=5 // pred_region
        %s102 = ssub.s32 %s15, 1
        // Predicated region
        $region13: #{tpu_custom_call.1} parent=11 // pred_check
          %p103 = pneg %p62
        $region14: #{tpu_custom_call.1} parent=11 // pred_check_branch
          %105 = sbr.rel (%p103) target = $region16
        $region15: #{tpu_custom_call.1} parent=11 // pred_region
          %s107 = ssub.s32 3072, 3072
          %108 = vsyncadd [#allocation6], %s107
          %s109 = sshll.u32 [#allocation5], 4
          %s110 = int_to_ptr.vmem [resolvable:$true] %s109
          %115 = dma.hbm_to_vmem [thread:$0]  %s1, 3072, %s110, [#allocation6], 192, 192, 12
        $region16: #{tpu_custom_call.1} parent=11 // pred_fallthru
          _
      $region12: #{tpu_custom_call.1} parent=5 // pred_fallthru
        _
      %p116 = scmp.lt.s32.totalorder %s15, 2
      // Predicated region
      $region17: #{tpu_custom_call.1} parent=5 // pred_check
        %p117 = pneg %p116
      $region18: #{tpu_custom_call.1} parent=5 // pred_check_branch
        %119 = sbr.rel (%p117) target = $region20
      $region19: #{tpu_custom_call.1} parent=5 // pred_region
        // Predicated region
        $region21: #{tpu_custom_call.1} parent=19 // pred_check
          %p120 = pneg %p35
        $region22: #{tpu_custom_call.1} parent=19 // pred_check_branch
          %122 = sbr.rel (%p120) target = $region24
        $region23: #{tpu_custom_call.1} parent=19 // pred_region
          %s123 = sand.u32 %s25, 1
          %s124 = scalar_lea.sflag [#allocation3], %s123
          %s125 = sand.u32 %s25, 1
          %s126 = smul.addr %s125, 16
          %s127 = scalar_lea.vmem [#allocation2], %s126
          %s128 = smul.u32 4, %s15
          %s130 = ssub.s32 256, 256
          %131 = vsyncadd %s124, %s130
          %s132 = smul.addr %s128, 64
          %s133 = scalar_lea.hbm %s0, %s132
          %s134 = sshll.u32 %s127, 4
          %s135 = int_to_ptr.vmem [resolvable:$true] %s134
          %140 = dma.hbm_to_vmem [thread:$0]  %s133, 256, %s135, %s124, 64, 64, 4
        $region24: #{tpu_custom_call.1} parent=19 // pred_fallthru
          _
      $region20: #{tpu_custom_call.1} parent=5 // pred_fallthru
        _
      %p141 = scmp.le.s32.totalorder 1, %s15
      %p142 = scmp.lt.s32.totalorder %s15, 3
      %p143 = pnand %p141, %p142
      %p144 = pneg %p143
      // Predicated region
      $region25: #{tpu_custom_call.1} parent=5 // pred_check
        _
      $region26: #{tpu_custom_call.1} parent=5 // pred_check_branch
        %146 = sbr.rel (%p143) target = $region28
      $region27: #{tpu_custom_call.1} parent=5 // pred_region
        %s147 = ssub.s32 %s15, 1
        %s148 = sand.u32 %s28, 1
        %s149 = scalar_lea.sflag [#allocation3], %s148
        %s150 = sand.u32 %s28, 1
        %s151 = smul.addr %s150, 16
        %s152 = scalar_lea.vmem [#allocation2], %s151
        // Predicated region
        $region29: #{tpu_custom_call.1} parent=27 // pred_check
          %p153 = pneg %p41
        $region30: #{tpu_custom_call.1} parent=27 // pred_check_branch
          %155 = sbr.rel (%p153) target = $region32
        $region31: #{tpu_custom_call.1} parent=27 // pred_region
          %156 = dma.done %s149, 256
        $region32: #{tpu_custom_call.1} parent=27 // pred_fallthru
          _
        // Predicated region
        $region33: #{tpu_custom_call.1} parent=27 // pred_check
          %p157 = pneg %p62
        $region34: #{tpu_custom_call.1} parent=27 // pred_check_branch
          %159 = sbr.rel (%p157) target = $region36
        $region35: #{tpu_custom_call.1} parent=27 // pred_region
          %160 = dma.done [#allocation6], 3072
        $region36: #{tpu_custom_call.1} parent=27 // pred_fallthru
          _
        %s161 = sand.u32 %s28, 1
        %s162 = scalar_lea.sflag [#allocation3], %s161
        %s163 = sand.u32 %s28, 1
        %s164 = smul.addr %s163, 16
        %s165 = scalar_lea.vmem [#allocation2], %s164
        %p166 = pneg %p41
        %p167 = pneg %p38
        %p168 = pneg %p62
        %p169 = pneg %p59
        %p170 = pneg %p88
        %p171 = pneg %p85
        %s172 = sand.u32 %s75, 1
        %s173 = scalar_lea.sflag [#allocation4], %s172
        %s174 = sand.u32 %s75, 1
        %s175 = smul.addr %s174, 48
        %s176 = scalar_lea.vmem [#allocation7], %s175
        %s177 = smul.u32 4, %s20
        %s178 = smul.u32 4, %s20
        %v180 = vld [vmem:[%s152] sm:$0xf]
        %v181 = vld [vmem:[%s152 + $0x4] sm:$0xf]
        %v182 = vld [vmem:[%s152 + $0x8] sm:$0xf]
        %v183 = vld [vmem:[%s152 + $0xc] sm:$0xf]
        %v184 = vld [vmem:[#allocation5] sm:$0xff]
        %v185 = vld [vmem:[#allocation5 + $0x8] sm:$0xf]
        %v186 = vld [vmem:[#allocation5 + $0xc] sm:$0xff]
        %v187 = vld [vmem:[#allocation5 + $0x14] sm:$0xf]
        %v188 = vld [vmem:[#allocation5 + $0x18] sm:$0xff]
        %v189 = vld [vmem:[#allocation5 + $0x20] sm:$0xf]
        %v190 = vld [vmem:[#allocation5 + $0x24] sm:$0xff]
        %v191 = vld [vmem:[#allocation5 + $0x2c] sm:$0xf]
        %v192 = vld [vmem:[#allocation5 + $0x30] sm:$0xff]
        %v193 = vld [vmem:[#allocation5 + $0x38] sm:$0xf]
        %v194 = vld [vmem:[#allocation5 + $0x3c] sm:$0xff]
        %v195 = vld [vmem:[#allocation5 + $0x44] sm:$0xf]
        %v196 = vld [vmem:[#allocation5 + $0x48] sm:$0xff]
        %v197 = vld [vmem:[#allocation5 + $0x50] sm:$0xf]
        %v198 = vld [vmem:[#allocation5 + $0x54] sm:$0xff]
        %v199 = vld [vmem:[#allocation5 + $0x5c] sm:$0xf]
        %v200 = vld [vmem:[#allocation5 + $0x60] sm:$0xff]
        %v201 = vld [vmem:[#allocation5 + $0x68] sm:$0xf]
        %v202 = vld [vmem:[#allocation5 + $0x6c] sm:$0xff]
        %v203 = vld [vmem:[#allocation5 + $0x74] sm:$0xf]
        %v204 = vld [vmem:[#allocation5 + $0x78] sm:$0xff]
        %v205 = vld [vmem:[#allocation5 + $0x80] sm:$0xf]
        %v206 = vld [vmem:[#allocation5 + $0x84] sm:$0xff]
        %v207 = vld [vmem:[#allocation5 + $0x8c] sm:$0xf]
        %v208 = vld [vmem:[#allocation5 + $0x90] sm:$0xff]
        %v209 = vld [vmem:[#allocation5 + $0x98] sm:$0xf]
        %v210 = vld [vmem:[#allocation5 + $0x9c] sm:$0xff]
        %v211 = vld [vmem:[#allocation5 + $0xa4] sm:$0xf]
        %v212 = vld [vmem:[#allocation5 + $0xa8] sm:$0xff]
        %v213 = vld [vmem:[#allocation5 + $0xb0] sm:$0xf]
        %v214 = vld [vmem:[#allocation5 + $0xb4] sm:$0xff]
        %v215 = vld [vmem:[#allocation5 + $0xbc] sm:$0xf]
        %v220 = vunpack.c.l.b16 %v180
        %v221 = vunpack.c.l.b16 %v181
        %v222 = vunpack.c.l.b16 %v182
        %v223 = vunpack.c.l.b16 %v183
        %v224 = vpack.c.b16 %v221, %v220
        %v225 = vpack.c.b16 %v223, %v222
        %v260 = vunpack.c.l.b16 %v184
        %v261 = vunpack.c.h.b16 %v184
        %v262 = vunpack.c.l.b16 %v185
        %v263 = vunpack.c.l.b16 %v186
        %v264 = vunpack.c.h.b16 %v186
        %v265 = vunpack.c.l.b16 %v187
        %v266 = vunpack.c.l.b16 %v188
        %v267 = vunpack.c.h.b16 %v188
        %v268 = vunpack.c.l.b16 %v189
        %v269 = vunpack.c.l.b16 %v190
        %v270 = vunpack.c.h.b16 %v190
        %v271 = vunpack.c.l.b16 %v191
        %v272 = vunpack.c.l.b16 %v192
        %v273 = vunpack.c.h.b16 %v192
        %v274 = vunpack.c.l.b16 %v193
        %v275 = vunpack.c.l.b16 %v194
        %v276 = vunpack.c.h.b16 %v194
        %v277 = vunpack.c.l.b16 %v195
        %v278 = vunpack.c.l.b16 %v196
        %v279 = vunpack.c.h.b16 %v196
        %v280 = vunpack.c.l.b16 %v197
        %v281 = vunpack.c.l.b16 %v198
        %v282 = vunpack.c.h.b16 %v198
        %v283 = vunpack.c.l.b16 %v199
        %v284 = vunpack.c.l.b16 %v200
        %v285 = vunpack.c.h.b16 %v200
        %v286 = vunpack.c.l.b16 %v201
        %v287 = vunpack.c.l.b16 %v202
        %v288 = vunpack.c.h.b16 %v202
        %v289 = vunpack.c.l.b16 %v203
        %v290 = vunpack.c.l.b16 %v204
        %v291 = vunpack.c.h.b16 %v204
        %v292 = vunpack.c.l.b16 %v205
        %v293 = vunpack.c.l.b16 %v206
        %v294 = vunpack.c.h.b16 %v206
        %v295 = vunpack.c.l.b16 %v207
        %v296 = vunpack.c.l.b16 %v208
        %v297 = vunpack.c.h.b16 %v208
        %v298 = vunpack.c.l.b16 %v209
        %v299 = vunpack.c.l.b16 %v210
        %v300 = vunpack.c.h.b16 %v210
        %v301 = vunpack.c.l.b16 %v211
        %v302 = vunpack.c.l.b16 %v212
        %v303 = vunpack.c.h.b16 %v212
        %v304 = vunpack.c.l.b16 %v213
        %v305 = vunpack.c.l.b16 %v214
        %v306 = vunpack.c.h.b16 %v214
        %v307 = vunpack.c.l.b16 %v215
        %v308 = vpack.c.b16 %v263, %v260
        %v309 = vpack.c.b16 %v264, %v261
        %v310 = vpack.c.b16 %v265, %v262
        %v311 = vpack.c.b16 %v269, %v266
        %v312 = vpack.c.b16 %v270, %v267
        %v313 = vpack.c.b16 %v271, %v268
        %v314 = vpack.c.b16 %v275, %v272
        %v315 = vpack.c.b16 %v276, %v273
        %v316 = vpack.c.b16 %v277, %v274
        %v317 = vpack.c.b16 %v281, %v278
        %v318 = vpack.c.b16 %v282, %v279
        %v319 = vpack.c.b16 %v283, %v280
        %v320 = vpack.c.b16 %v287, %v284
        %v321 = vpack.c.b16 %v288, %v285
        %v322 = vpack.c.b16 %v289, %v286
        %v323 = vpack.c.b16 %v293, %v290
        %v324 = vpack.c.b16 %v294, %v291
        %v325 = vpack.c.b16 %v295, %v292
        %v326 = vpack.c.b16 %v299, %v296
        %v327 = vpack.c.b16 %v300, %v297
        %v328 = vpack.c.b16 %v301, %v298
        %v329 = vpack.c.b16 %v305, %v302
        %v330 = vpack.c.b16 %v306, %v303
        %v331 = vpack.c.b16 %v307, %v304
        %356 = vmatprep.subr.bf16.mxu0 %v309
        %357 = vmatpush1.bf16.msra.mxu0 %v308
        %358 = vmatprep.subr.bf16.mxu0 %v312
        %359 = vmatpush1.bf16.msra.mxu0 %v311
        %360 = vmatprep.subr.bf16.mxu0 %v315
        %361 = vmatpush1.bf16.msra.mxu0 %v314
        %362 = vmatprep.subr.bf16.mxu0 %v318
        %363 = vmatpush1.bf16.msra.mxu0 %v317
        %364 = vmatprep.subr.bf16.mxu0 %v321
        %365 = vmatpush1.bf16.msra.mxu0 %v320
        %366 = vmatprep.subr.bf16.mxu0 %v324
        %367 = vmatpush1.bf16.msra.mxu0 %v323
        %368 = vmatprep.subr.bf16.mxu0 %v327
        %369 = vmatpush1.bf16.msra.mxu0 %v326
        %370 = vmatprep.subr.bf16.mxu0 %v330
        %371 = vmatpush1.bf16.msra.mxu0 %v329
        %372 = vmatprep.subr.bf16.mxu0 0
        %373 = vmatpush1.bf16.msra.mxu0 0
        %374 = vmatprep.subr.bf16.mxu0 0
        %375 = vmatpush1.bf16.msra.mxu0 0
        %376 = vmatprep.subr.bf16.mxu0 0
        %377 = vmatpush1.bf16.msra.mxu0 0
        %378 = vmatprep.subr.bf16.mxu0 0
        %379 = vmatpush1.bf16.msra.mxu0 0
        %380 = vmatprep.subr.bf16.mxu0 0
        %381 = vmatpush1.bf16.msra.mxu0 0
        %382 = vmatprep.subr.bf16.mxu0 0
        %383 = vmatpush1.bf16.msra.mxu0 0
        %384 = vmatprep.subr.bf16.mxu0 0
        %385 = vmatpush1.bf16.msra.mxu0 0
        %386 = vmatprep.subr.bf16.mxu0 0
        %387 = vmatpush1.bf16.msra.mxu0 0
        %388 = vmatprep.mubr.bf16.mxu0 0
        %389 = vmatmul.mubr.bf16.gmra.mrb[0].mxu0 %v224
        %v390 = vpop.f32.mrb[0].mxu0
        %v391 = vadd.f32 0.0, %v390
        %v392 = vpop.f32.mrb[0].mxu0
        %v393 = vadd.f32 0.0, %v392
        %v394 = vpop.f32.mrb[0].mxu0
        %v395 = vadd.f32 0.0, %v394
        %v396 = vpop.f32.mrb[0].mxu0
        %v397 = vadd.f32 0.0, %v396
        %398 = vmatprep.mubr.bf16.mxu0 0
        %399 = vmatmul.mubr.bf16.gmra.mrb[0].mxu0 %v225
        %v400 = vpop.f32.mrb[0].mxu0
        %v401 = vadd.f32 0.0, %v400
        %v402 = vpop.f32.mrb[0].mxu0
        %v403 = vadd.f32 0.0, %v402
        %v404 = vpop.f32.mrb[0].mxu0
        %v405 = vadd.f32 0.0, %v404
        %v406 = vpop.f32.mrb[0].mxu0
        %v407 = vadd.f32 0.0, %v406
        %408 = vdwg.mxu0
        %409 = vmatprep.subr.bf16.mxu0 0
        %410 = vmatpush1.bf16.msra.mxu0 %v310
        %411 = vmatprep.subr.bf16.mxu0 0
        %412 = vmatpush1.bf16.msra.mxu0 %v313
        %413 = vmatprep.subr.bf16.mxu0 0
        %414 = vmatpush1.bf16.msra.mxu0 %v316
        %415 = vmatprep.subr.bf16.mxu0 0
        %416 = vmatpush1.bf16.msra.mxu0 %v319
        %417 = vmatprep.subr.bf16.mxu0 0
        %418 = vmatpush1.bf16.msra.mxu0 %v322
        %419 = vmatprep.subr.bf16.mxu0 0
        %420 = vmatpush1.bf16.msra.mxu0 %v325
        %421 = vmatprep.subr.bf16.mxu0 0
        %422 = vmatpush1.bf16.msra.mxu0 %v328
        %423 = vmatprep.subr.bf16.mxu0 0
        %424 = vmatpush1.bf16.msra.mxu0 %v331
        %425 = vmatprep.subr.bf16.mxu0 0
        %426 = vmatpush1.bf16.msra.mxu0 0
        %427 = vmatprep.subr.bf16.mxu0 0
        %428 = vmatpush1.bf16.msra.mxu0 0
        %429 = vmatprep.subr.bf16.mxu0 0
        %430 = vmatpush1.bf16.msra.mxu0 0
        %431 = vmatprep.subr.bf16.mxu0 0
        %432 = vmatpush1.bf16.msra.mxu0 0
        %433 = vmatprep.subr.bf16.mxu0 0
        %434 = vmatpush1.bf16.msra.mxu0 0
        %435 = vmatprep.subr.bf16.mxu0 0
        %436 = vmatpush1.bf16.msra.mxu0 0
        %437 = vmatprep.subr.bf16.mxu0 0
        %438 = vmatpush1.bf16.msra.mxu0 0
        %439 = vmatprep.subr.bf16.mxu0 0
        %440 = vmatpush1.bf16.msra.mxu0 0
        %441 = vmatprep.mubr.bf16.mxu0 0
        %442 = vmatmul.mubr.bf16.gmra.mrb[0].mxu0 %v224
        %v443 = vpop.f32.mrb[0].mxu0
        %v444 = vadd.f32 0.0, %v443
        %v445 = vpop.f32.mrb[0].mxu0
        %v446 = vpop.f32.mrb[0].mxu0
        %v447 = vadd.f32 0.0, %v446
        %v448 = vpop.f32.mrb[0].mxu0
        %449 = vmatprep.mubr.bf16.mxu0 0
        %450 = vmatmul.mubr.bf16.gmra.mrb[0].mxu0 %v225
        %v451 = vpop.f32.mrb[0].mxu0
        %v452 = vadd.f32 0.0, %v451
        %v453 = vpop.f32.mrb[0].mxu0
        %v454 = vpop.f32.mrb[0].mxu0
        %v455 = vadd.f32 0.0, %v454
        %v456 = vpop.f32.mrb[0].mxu0
        %457 = vdwg.mxu0
        %v458 = vpack.c.bf16 %v395, %v391
        %v459 = vpack.c.bf16 %v405, %v401
        %v462 = vunpack.c.l.b16 %v458
        %v463 = vunpack.c.h.b16 %v458
        %v464 = vunpack.c.l.b16 %v459
        %v465 = vunpack.c.h.b16 %v459
        %v466 = vpack.c.b16 %v462, %v462
        %v467 = vpack.c.b16 %v463, %v463
        %v468 = vpack.c.b16 %v464, %v464
        %v469 = vpack.c.b16 %v465, %v465
        %474 = vst [vmem:[%s176] sm:$0xf] %v466
        %475 = vst [vmem:[%s176 + $0x4] sm:$0xf] %v467
        %476 = vst [vmem:[%s176 + $0x8] sm:$0xf] %v468
        %477 = vst [vmem:[%s176 + $0xc] sm:$0xf] %v469
        %v478 = vpack.c.bf16 %v397, %v393
        %v479 = vpack.c.bf16 %v407, %v403
        %v482 = vunpack.c.l.b16 %v478
        %v483 = vunpack.c.h.b16 %v478
        %v484 = vunpack.c.l.b16 %v479
        %v485 = vunpack.c.h.b16 %v479
        %v486 = vpack.c.b16 %v482, %v482
        %v487 = vpack.c.b16 %v483, %v483
        %v488 = vpack.c.b16 %v484, %v484
        %v489 = vpack.c.b16 %v485, %v485
        %s494 = scalar_lea.vmem %s176, 16 [#allocation7]
        %495 = vst [vmem:[%s494] sm:$0xf] %v486
        %496 = vst [vmem:[%s494 + $0x4] sm:$0xf] %v487
        %497 = vst [vmem:[%s494 + $0x8] sm:$0xf] %v488
        %498 = vst [vmem:[%s494 + $0xc] sm:$0xf] %v489
        %v499 = vpack.c.bf16 %v447, %v444
        %v500 = vpack.c.bf16 %v455, %v452
        %v503 = vunpack.c.l.b16 %v499
        %v504 = vunpack.c.h.b16 %v499
        %v505 = vunpack.c.l.b16 %v500
        %v506 = vunpack.c.h.b16 %v500
        %v507 = vpack.c.b16 %v503, %v503
        %v508 = vpack.c.b16 %v504, %v504
        %v509 = vpack.c.b16 %v505, %v505
        %v510 = vpack.c.b16 %v506, %v506
        %s515 = scalar_lea.vmem %s176, 32 [#allocation7]
        %516 = vst [vmem:[%s515] sm:$0xf] %v507
        %517 = vst [vmem:[%s515 + $0x4] sm:$0xf] %v508
        %518 = vst [vmem:[%s515 + $0x8] sm:$0xf] %v509
        %519 = vst [vmem:[%s515 + $0xc] sm:$0xf] %v510
        %s520 = sand.u32 %s75, 1
        %s521 = scalar_lea.sflag [#allocation4], %s520
        %s522 = sand.u32 %s75, 1
        %s523 = smul.addr %s522, 48
        %s524 = scalar_lea.vmem [#allocation7], %s523
        // Predicated region
        $region37: #{tpu_custom_call.1} parent=27 // pred_check
          %p525 = pneg %p85
        $region38: #{tpu_custom_call.1} parent=27 // pred_check_branch
          %527 = sbr.rel (%p525) target = $region40
        $region39: #{tpu_custom_call.1} parent=27 // pred_region
          #allocation9 [shape = 'u32[6]{0}', space=smem, size = 0x18, scoped, tag = 'DMA stride descriptor']
          %s528 = smul.u32 4, %s20
          %s530 = ssub.s32 768, 768
          %531 = vsyncadd %s521, %s530
          %s532 = smul.addr %s528, 64
          %s533 = scalar_lea.hbm %s2, %s532
          %s535 = sshll.u32 1, 14
          %s536 = sxor.u32 4294967295, %s535
          %s539 = sshll.u32 7, 18
          %s540 = sxor.u32 4294967295, %s539
          %s541 = sand.u32 0, %s540
          %s543 = sor.u32 %s541, 0
          %s545 = sshll.u32 3, 24
          %s546 = sxor.u32 4294967295, %s545
          %s547 = sand.u32 %s543, %s546
          %s549 = sor.u32 %s547, 0
          %s550 = sshll.u32 %s524, 4
          %s551 = int_to_ptr.vmem [resolvable:$true] %s550
          %557 = sst [smem:[#allocation9]] 256
          %s558 = scalar_lea.smem [#allocation9], 1
          %559 = sst [smem:[%s558]] 512
          %s560 = scalar_lea.smem [#allocation9], 2
          %561 = sst [smem:[%s560]] 4
          %s562 = scalar_lea.smem [#allocation9], 3
          %563 = sst [smem:[%s562]] 64
          %s564 = scalar_lea.smem [#allocation9], 4
          %565 = sst [smem:[%s564]] 64
          %s566 = scalar_lea.smem [#allocation9], 5
          %567 = sst [smem:[%s566]] 4
          %569 = dma.general %s551, 768, %s533, %s521, [#allocation8], [#allocation9], %s549, 0
        $region40: #{tpu_custom_call.1} parent=27 // pred_fallthru
          _
      $region28: #{tpu_custom_call.1} parent=5 // pred_fallthru
        _
      %p570 = scmp.le.s32.totalorder 2, %s15
      // Predicated region
      $region41: #{tpu_custom_call.1} parent=5 // pred_check
        %p571 = pneg %p570
      $region42: #{tpu_custom_call.1} parent=5 // pred_check_branch
        %573 = sbr.rel (%p571) target = $region44
      $region43: #{tpu_custom_call.1} parent=5 // pred_region
        %s574 = ssub.s32 %s15, 2
        // Predicated region
        $region45: #{tpu_custom_call.1} parent=43 // pred_check
          %p575 = pneg %p91
        $region46: #{tpu_custom_call.1} parent=43 // pred_check_branch
          %577 = sbr.rel (%p575) target = $region48
        $region47: #{tpu_custom_call.1} parent=43 // pred_region
          %s578 = sand.u32 %s76, 1
          %s579 = scalar_lea.sflag [#allocation4], %s578
          %s580 = sand.u32 %s76, 1
          %s581 = smul.addr %s580, 48
          %s582 = scalar_lea.vmem [#allocation7], %s581
          %583 = dma.done %s579, 768
        $region48: #{tpu_custom_call.1} parent=43 // pred_fallthru
          _
      $region44: #{tpu_custom_call.1} parent=5 // pred_fallthru
        _
    $region6: #{tpu_custom_call.1} parent=1 // loop_footer
      %s19 = sadd.s32 1, %s15
    $region7: #{tpu_custom_call.1} parent=1 // loop_footer_branch
      %14 = sbr.rel target = $region3
    $region8: #{tpu_custom_call.1} parent=1 // loop_exit
      _
    %584 = vsyncpa [#allocation3], 1
    %s585 = scalar_lea.sflag [#allocation3], 1
    %586 = vsyncpa %s585, 1
    %587 = vsyncpa [#allocation6], 1
    %588 = vsyncpa [#allocation4], 1
    %s589 = scalar_lea.sflag [#allocation4], 1
    %590 = vsyncpa %s589, 1

</llo_original>
